<compile_context>
chip_gen: v6e
topology: v6e:2x2x1
jax: 0.10.0
libtpu: 0.0.40
codegen_flags: <defaults>
</compile_context>

<pallas_src>
import math

import jax
import jax.numpy as jnp
import numpy as np
from jax.experimental import pallas as pl
from jax.experimental.pallas import tpu as pltpu

SQRT_2PI = math.sqrt(2.0 * math.pi)
INV_SQRT_2PI = 1.0 / SQRT_2PI
SQRT_2 = math.sqrt(2.0)

_LANES = 128
_SUBLANES = 8
_MAX_BLOCK_ROWS = 512


# ----------------------------- layout helpers --------------------------------

def _plan(n):
    """Rows of the (R,128) slab for n elements; R multiple of 8 (and of the
    block size once gridded)."""
    rows = -(-n // _LANES)                              # ceil(n/128)
    rows = max(_SUBLANES, -(-rows // _SUBLANES) * _SUBLANES)
    if rows > _MAX_BLOCK_ROWS:
        rows = -(-rows // _MAX_BLOCK_ROWS) * _MAX_BLOCK_ROWS
        tr = _MAX_BLOCK_ROWS
    else:
        tr = rows
    return rows, tr, rows * _LANES                      # R, TR, PN


def _block_rows(r):
    return _MAX_BLOCK_ROWS if r > _MAX_BLOCK_ROWS else r


def _to_plane(x, pn, fill=0.0):
    """Flatten, pad to pn elements with `fill`, reshape to (pn//128, 128)."""
    x = x.reshape(-1).astype(jnp.float32)
    n = x.shape[0]
    if pn != n:
        x = jnp.pad(x, (0, pn - n), constant_values=fill)
    return x.reshape(pn // _LANES, _LANES)


def _plane_spec(tr):
    return pl.BlockSpec((tr, _LANES), lambda i: (i, 0))


# ----------------------------- in-kernel math ---------------------------------

def _softplus(x):
    # numerically stable, matches torch.nn.Softplus(beta=1, threshold=20)
    sp = jnp.maximum(x, 0.0) + jnp.log(1.0 + jnp.exp(-jnp.abs(x)))
    return jnp.where(x > 20.0, x, sp)


def _recip(x):
    # EUP approximate reciprocal + one Newton step -> ~f32 accuracy, no divide.
    inv = pl.reciprocal(x, approx=True)
    return inv * (2.0 - x * inv)


def _erfinv(x):
    # Giles (2010) single-precision rational approximation of erfinv.
    t = jnp.maximum((1.0 - x) * (1.0 + x), jnp.float32(1e-38))  # avoid log(0)
    w = -jnp.log(t)
    wc = w - 2.5
    p1 = jnp.float32(2.81022636e-08)
    p1 = 3.43273939e-07 + p1 * wc
    p1 = -3.5233877e-06 + p1 * wc
    p1 = -4.39150654e-06 + p1 * wc
    p1 = 0.00021858087 + p1 * wc
    p1 = -0.00125372503 + p1 * wc
    p1 = -0.00417768164 + p1 * wc
    p1 = 0.246640727 + p1 * wc
    p1 = 1.50140941 + p1 * wc
    wt = jnp.sqrt(jnp.maximum(w, 5.0)) - 3.0
    p2 = jnp.float32(-0.000200214257)
    p2 = 0.000100950558 + p2 * wt
    p2 = 0.00134934322 + p2 * wt
    p2 = -0.00367342844 + p2 * wt
    p2 = 0.00573950773 + p2 * wt
    p2 = -0.0076224613 + p2 * wt
    p2 = 0.00943887047 + p2 * wt
    p2 = 1.00167406 + p2 * wt
    p2 = 2.83297682 + p2 * wt
    out = jnp.where(w < 5.0, p1, p2) * x
    # |x| == 1 -> +/-inf (torch.erfinv boundary behaviour) instead of NaN.
    return jnp.where(jnp.abs(x) >= 1.0, jnp.sign(x) * jnp.float32(jnp.inf), out)


def _pdf_math(f, mu, sg):
    inv_sg = _recip(sg)
    z = (f - mu) * inv_sg
    return jnp.exp(-0.5 * z * z) * (inv_sg * INV_SQRT_2PI)


def _loss_partial(f, mu, sg):
    """Masked NLL partial (sum, count) of one (TR,128) block, each shape (1,1).

    Padded entries of f are NaN, so they are excluded by the valid mask.
    """
    valid = jnp.logical_not(jnp.isnan(f))
    f_safe = jnp.where(valid, f, 0.0)
    sgc = jnp.maximum(sg, 1e-6)
    inv = _recip(sgc)
    t = jnp.log(sgc) + 0.5 * jnp.square((mu - f_safe) * inv)
    contrib = jnp.where(valid, t, 0.0)
    return (jnp.sum(contrib, keepdims=True),
            jnp.sum(valid.astype(jnp.float32), keepdims=True))


# --------------------------------- kernels ------------------------------------

def _fused_kernel(z_ref, mu_ref, sgr_ref, fpdf_ref, floss_ref,
                  sg_ref, pdf_ref, if_ref, loss_ref,
                  sum_acc, cnt_acc):
    i = pl.program_id(0)

    @pl.when(i == 0)
    def _():
        sum_acc[...] = jnp.zeros_like(sum_acc)
        cnt_acc[...] = jnp.zeros_like(cnt_acc)

    mu = mu_ref[...]
    sg = _softplus(sgr_ref[...])
    sg_ref[...] = sg

    # pdf
    pdf_ref[...] = _pdf_math(fpdf_ref[...], mu, sg)

    # iF: pure FMA against host/XLA-precomputed z_q = erfinv(2q-1)*sqrt(2),
    # read as SMEM scalars (Q is a tiny static constant -> unrolled loop).
    for q in range(if_ref.shape[0]):
        if_ref[q] = mu + sg * z_ref[q]

    # masked NLL accumulation across grid steps
    s, c = _loss_partial(floss_ref[...], mu, sg)
    sum_acc[...] += s
    cnt_acc[...] += c

    @pl.when(i == pl.num_programs(0) - 1)
    def _():
        # NaN <=> "no valid observations" (the original module returned None).
        loss_ref[...] = jnp.where(cnt_acc[...] > 0.0,
                                  sum_acc[...] / cnt_acc[...],
                                  jnp.float32(jnp.nan))


def _pdf_kernel(mu_ref, sgr_ref, f_ref, o_ref):
    mu = mu_ref[...]
    sg = _softplus(sgr_ref[...])
    o_ref[...] = _pdf_math(f_ref[...], mu, sg)


def _if_kernel(mu_ref, sgr_ref, f_ref, o_ref):
    # Generic path (arbitrary per-element quantiles): erfinv stays in-kernel.
    mu = mu_ref[...]
    sg = _softplus(sgr_ref[...])
    for q in range(o_ref.shape[0]):
        o_ref[q] = mu + sg * (_erfinv(2.0 * f_ref[q] - 1.0) * SQRT_2)


def _loss_kernel(mu_ref, sgr_ref, f_ref, loss_ref, sum_acc, cnt_acc):
    i = pl.program_id(0)

    @pl.when(i == 0)
    def _():
        sum_acc[...] = jnp.zeros_like(sum_acc)
        cnt_acc[...] = jnp.zeros_like(cnt_acc)

    mu = mu_ref[...]
    sg = _softplus(sgr_ref[...])
    s, c = _loss_partial(f_ref[...], mu, sg)
    sum_acc[...] += s
    cnt_acc[...] += c

    @pl.when(i == pl.num_programs(0) - 1)
    def _():
        loss_ref[...] = jnp.where(cnt_acc[...] > 0.0,
                                  sum_acc[...] / cnt_acc[...],
                                  jnp.float32(jnp.nan))


# ------------------------------ jitted wrappers -------------------------------

@jax.jit
def _evaluate_jit(mu_plane, sgr_plane, quantiles, f_pdf, f_loss):
    B, L = f_pdf.shape
    n = B * L
    R = mu_plane.shape[0]
    PN = R * _LANES
    TR = _block_rows(R)
    G = R // TR
    Q = quantiles.shape[0]

    fpdf_p = _to_plane(f_pdf, PN, 0.0)
    floss_p = _to_plane(f_loss, PN, np.nan)   # NaN pads are excluded by the mask

    # Static-quantile trick: erfinv runs on Q values only (one tiny XLA op).
    zq = jax.scipy.special.erfinv(
        2.0 * quantiles.astype(jnp.float32) - 1.0) * SQRT_2      # (Q,)

    plane = _plane_spec(TR)
    sg_p, pdf_p, if_p, loss = pl.pallas_call(
        _fused_kernel,
        grid=(G,),
        in_specs=[
            pl.BlockSpec(memory_space=pltpu.MemorySpace.SMEM),   # z_q scalars
            plane, plane, plane, plane,
        ],
        out_specs=(
            plane,
            plane,
            pl.BlockSpec((Q, TR, _LANES), lambda i: (0, i, 0)),
            pl.BlockSpec((1, 1), lambda i: (0, 0)),
        ),
        out_shape=(
            jax.ShapeDtypeStruct((R, _LANES), jnp.float32),      # sigma
            jax.ShapeDtypeStruct((R, _LANES), jnp.float32),      # pdf
            jax.ShapeDtypeStruct((Q, R, _LANES), jnp.float32),   # iF
            jax.ShapeDtypeStruct((1, 1), jnp.float32),           # loss
        ),
        scratch_shapes=[pltpu.VMEM((1, 1), jnp.float32),
                        pltpu.VMEM((1, 1), jnp.float32)],
        compiler_params=pltpu.CompilerParams(
            dimension_semantics=("arbitrary",)),
    )(zq, mu_plane, sgr_plane, fpdf_p, floss_p)

    sg = sg_p.reshape(-1)[:n].reshape(B, L)
    pdf = pdf_p.reshape(-1)[:n].reshape(B, L)
    iF = if_p.reshape(Q, PN)[:, :n].reshape(Q, B, L)   # lane-dense (Q,B,L) layout
    return sg, pdf, iF, loss[0, 0]


@jax.jit
def _pdf_jit(mu_plane, sgr_plane, f):
    B, L = f.shape
    n = B * L
    R = mu_plane.shape[0]
    PN = R * _LANES
    TR = _block_rows(R)
    plane = _plane_spec(TR)
    out = pl.pallas_call(
        _pdf_kernel,
        grid=(R // TR,),
        in_specs=[plane, plane, plane],
        out_specs=plane,
        out_shape=jax.ShapeDtypeStruct((R, _LANES), jnp.float32),
        compiler_params=pltpu.CompilerParams(
            dimension_semantics=("parallel",)),
    )(mu_plane, sgr_plane, _to_plane(f, PN, 0.0))
    return out.reshape(-1)[:n].reshape(B, L)


@jax.jit
def _if_jit(mu_plane, sgr_plane, f):
    B, L, Q = f.shape
    n = B * L
    R = mu_plane.shape[0]
    PN = R * _LANES
    TR = _block_rows(R)
    f2 = jnp.transpose(f.astype(jnp.float32), (2, 0, 1)).reshape(Q, n)
    if PN != n:
        f2 = jnp.pad(f2, ((0, 0), (0, PN - n)), constant_values=0.5)
    f3 = f2.reshape(Q, R, _LANES)
    plane = _plane_spec(TR)
    qspec = pl.BlockSpec((Q, TR, _LANES), lambda i: (0, i, 0))
    out = pl.pallas_call(
        _if_kernel,
        grid=(R // TR,),
        in_specs=[plane, plane, qspec],
        out_specs=qspec,
        out_shape=jax.ShapeDtypeStruct((Q, R, _LANES), jnp.float32),
        compiler_params=pltpu.CompilerParams(
            dimension_semantics=("parallel",)),
    )(mu_plane, sgr_plane, f3)
    return jnp.transpose(out.reshape(Q, PN)[:, :n].reshape(Q, B, L), (1, 2, 0))


@jax.jit
def _loss_jit(mu_plane, sgr_plane, f):
    R = mu_plane.shape[0]
    PN = R * _LANES
    TR = _block_rows(R)
    plane = _plane_spec(TR)
    out = pl.pallas_call(
        _loss_kernel,
        grid=(R // TR,),
        in_specs=[plane, plane, plane],
        out_specs=pl.BlockSpec((1, 1), lambda i: (0, 0)),
        out_shape=jax.ShapeDtypeStruct((1, 1), jnp.float32),
        scratch_shapes=[pltpu.VMEM((1, 1), jnp.float32),
                        pltpu.VMEM((1, 1), jnp.float32)],
        compiler_params=pltpu.CompilerParams(
            dimension_semantics=("arbitrary",)),
    )(mu_plane, sgr_plane, _to_plane(f, PN, np.nan))
    return out[0, 0]


# ---------------------------------- model -------------------------------------

class NormModel:
    """JAX/Pallas port of the PyTorch NORM Model. forward() returns None.

    evaluate(f_pdf, quantiles, f_loss) is the fused single-pass hot path:
      * quantiles is a static (Q,) vector in (0,1); erfinv is evaluated on Q
        values once and iF becomes a pure in-kernel FMA.
      * iF is returned in the lane-dense (Q, B, L) layout (no output transpose).
      * loss is a device scalar; NaN corresponds to the original's `None`.
    The per-method pdf/iF/loss entry points keep the original API (iF accepts
    an arbitrary (B, L, Q) tensor and runs erfinv in-kernel).
    """

    def __init__(self, lead_time):
        self.lead_time = lead_time
        self.number_of_outputs = 2 * lead_time
        self._mu = None
        self._mu_plane = None
        self._sgr_plane = None
        self.model_parameters = None   # (mu, sigma), filled by evaluate()

    def forward(self):
        return None

    def set_parameters(self, parameters):
        parameters = jnp.asarray(parameters, jnp.float32)
        B = parameters.shape[0]
        p = parameters.reshape(B, self.lead_time, 2)
        mu_raw = p[:, :, 0]
        sg_raw = p[:, :, 1]
        n = B * self.lead_time
        _, _, PN = _plan(n)
        # Pack once into sublane/lane-dense (R,128) planes; mu needs no kernel
        # work at all (returned as-is), sigma_raw gets softplus'd in-kernel.
        self._mu = mu_raw
        self._mu_plane = _to_plane(mu_raw, PN, 0.0)
        self._sgr_plane = _to_plane(sg_raw, PN, 0.0)
        self.model_parameters = None

    def evaluate(self, f_pdf, quantiles, f_loss):
        sg, pdf, iF, loss = _evaluate_jit(self._mu_plane, self._sgr_plane,
                                          quantiles, f_pdf, f_loss)
        self.model_parameters = (self._mu, sg)
        return self._mu, sg, pdf, iF, loss

    def pdf(self, f):
        return _pdf_jit(self._mu_plane, self._sgr_plane, f)

    def iF(self, f):
        return _if_jit(self._mu_plane, self._sgr_plane, f)

    def loss(self, f):
        # NaN <=> "all observations NaN" (original returned None).
        return _loss_jit(self._mu_plane, self._sgr_plane, f)


# ----------------------------------- main --------------------------------------

if __name__ == "__main__":
    B, LEAD_TIME, Q = 2, 8, 4
    key = jax.random.PRNGKey(0)
    k_params, k_pdf, k_q, k_loss = jax.random.split(key, 4)

    params = jax.random.normal(k_params, (B, 2 * LEAD_TIME), dtype=jnp.float32)
    f_pdf = jax.random.normal(k_pdf, (B, LEAD_TIME), dtype=jnp.float32)
    f_loss = jax.random.normal(k_loss, (B, LEAD_TIME), dtype=jnp.float32)
    f_loss = f_loss.at[0, 1].set(jnp.nan).at[1, 3].set(jnp.nan)
    quantiles = jnp.array([0.1, 0.25, 0.5, 0.9], dtype=jnp.float32)
    f_q = jax.random.uniform(k_q, (B, LEAD_TIME, Q), dtype=jnp.float32,
                             minval=0.01, maxval=0.99)

    model = NormModel(LEAD_TIME)
    model.set_parameters(params)

    # Fused single-launch hot path: sigma, pdf, iF and the masked NLL all come
    # out of ONE pallas_call; mu needs no kernel work; no host sync anywhere.
    mu, sg, pdf_out, if_out, loss_out = model.evaluate(f_pdf, quantiles, f_loss)
    jax.block_until_ready((mu, sg, pdf_out, if_out, loss_out))

    # Per-method API-parity paths.
    pdf_m = model.pdf(f_pdf)
    if_m = model.iF(f_q)
    loss_m = model.loss(f_loss)
    jax.block_until_ready((pdf_m, if_m, loss_m))

    # ----- references (pure JAX f32, exact divides) -----
    p = params.reshape(B, LEAD_TIME, 2)
    mu_ref = p[:, :, 0]
    sg_ref = jax.nn.softplus(p[:, :, 1])
    pdf_ref = jnp.exp(-0.5 * ((f_pdf - mu_ref) / sg_ref) ** 2) / (sg_ref * SQRT_2PI)
    zq_ref = jax.scipy.special.erfinv(2.0 * quantiles - 1.0) * SQRT_2
    if_ref = mu_ref[None] + sg_ref[None] * zq_ref[:, None, None]      # (Q,B,L)
    ifm_ref = (mu_ref[:, :, None]
               + sg_ref[:, :, None] * jax.scipy.special.erfinv(2.0 * f_q - 1.0) * SQRT_2)
    valid = ~jnp.isnan(f_loss)
    sgc = jnp.maximum(sg_ref, 1e-6)
    T = jnp.where(valid,
                  jnp.log(sgc) + 0.5 * ((mu_ref - jnp.where(valid, f_loss, 0.0)) / sgc) ** 2,
                  0.0)
    loss_ref = jnp.sum(T) / jnp.sum(valid.astype(jnp.float32))

    np.testing.assert_allclose(np.asarray(mu), np.asarray(mu_ref), atol=1e-6, rtol=1e-6)
    np.testing.assert_allclose(np.asarray(sg), np.asarray(sg_ref), atol=1e-5, rtol=1e-5)
    np.testing.assert_allclose(np.asarray(pdf_out), np.asarray(pdf_ref), atol=1e-5, rtol=1e-3)
    np.testing.assert_allclose(np.asarray(if_out), np.asarray(if_ref), atol=1e-4, rtol=1e-4)
    np.testing.assert_allclose(float(loss_out), float(loss_ref), atol=1e-5, rtol=1e-4)
    np.testing.assert_allclose(np.asarray(pdf_m), np.asarray(pdf_ref), atol=1e-5, rtol=1e-3)
    np.testing.assert_allclose(np.asarray(if_m), np.asarray(ifm_ref), atol=1e-3, rtol=1e-3)
    np.testing.assert_allclose(float(loss_m), float(loss_ref), atol=1e-5, rtol=1e-4)

    print("KERNEL_OK")
</pallas_src>

<mosaic_0001>
module attributes {stable_mosaic.version = 11 : i64} {
  func.func @_fused_kernel(%arg0: i32, %arg1: memref<4xf32, #tpu.memory_space<smem>>, %arg2: memref<8x128xf32, #tpu.memory_space<vmem>>, %arg3: memref<8x128xf32, #tpu.memory_space<vmem>>, %arg4: memref<8x128xf32, #tpu.memory_space<vmem>>, %arg5: memref<8x128xf32, #tpu.memory_space<vmem>>, %arg6: memref<8x128xf32, #tpu.memory_space<vmem>>, %arg7: memref<8x128xf32, #tpu.memory_space<vmem>>, %arg8: memref<4x8x128xf32, #tpu.memory_space<vmem>>, %arg9: memref<1x1xf32, #tpu.memory_space<vmem>>, %arg10: memref<1x1xf32, #tpu.memory_space<vmem>>, %arg11: memref<1x1xf32, #tpu.memory_space<vmem>>) attributes {dimension_semantics = [#tpu.dimension_semantics<arbitrary>], iteration_bounds = array<i64: 1>, scalar_prefetch = 0 : i64, scratch_operands = 2 : i64, tpu.core_type = #tpu.core_type<tc>, window_params = [{transform_indices = @transform_0, window_bounds = array<i64: 4>}, {transform_indices = @transform_1, window_bounds = array<i64: 8, 128>}, {transform_indices = @transform_2, window_bounds = array<i64: 8, 128>}, {transform_indices = @transform_3, window_bounds = array<i64: 8, 128>}, {transform_indices = @transform_4, window_bounds = array<i64: 8, 128>}, {transform_indices = @transform_5, window_bounds = array<i64: 8, 128>}, {transform_indices = @transform_6, window_bounds = array<i64: 8, 128>}, {transform_indices = @transform_7, window_bounds = array<i64: 4, 8, 128>}, {pipeline_mode = #tpu.pipeline_mode<synchronous>, transform_indices = @transform_8, window_bounds = array<i64: 1, 1>}]} {
    %c0_i32 = arith.constant 0 : i32
    %0 = arith.cmpi eq, %arg0, %c0_i32 : i32
    %1 = arith.extui %0 : i1 to i32
    %c0_i32_0 = arith.constant 0 : i32
    %2 = arith.cmpi ne, %1, %c0_i32_0 : i32
    scf.if %2 {
      %cst_49 = arith.constant 0.000000e+00 : f32
      %105 = vector.broadcast %cst_49 : f32 to vector<1x1xf32>
      %c0_50 = arith.constant 0 : index
      %c0_51 = arith.constant 0 : index
      %106 = vector.load %arg10[%c0_50, %c0_51] : memref<1x1xf32, #tpu.memory_space<vmem>>, vector<1x1xf32>
      tpu.vector_store %arg10[%c0_50, %c0_51], %105 {strides = array<i32>} : memref<1x1xf32, #tpu.memory_space<vmem>>, vector<1x1xf32>,
      %cst_52 = arith.constant 0.000000e+00 : f32
      %107 = vector.broadcast %cst_52 : f32 to vector<1x1xf32>
      %c0_53 = arith.constant 0 : index
      %c0_54 = arith.constant 0 : index
      %108 = vector.load %arg11[%c0_53, %c0_54] : memref<1x1xf32, #tpu.memory_space<vmem>>, vector<1x1xf32>
      tpu.vector_store %arg11[%c0_53, %c0_54], %107 {strides = array<i32>} : memref<1x1xf32, #tpu.memory_space<vmem>>, vector<1x1xf32>,
    } else {
    }
    %c0 = arith.constant 0 : index
    %c0_1 = arith.constant 0 : index
    %3 = vector.load %arg2[%c0, %c0_1] : memref<8x128xf32, #tpu.memory_space<vmem>>, vector<8x128xf32>
    %c0_2 = arith.constant 0 : index
    %c0_3 = arith.constant 0 : index
    %4 = vector.load %arg3[%c0_2, %c0_3] : memref<8x128xf32, #tpu.memory_space<vmem>>, vector<8x128xf32>
    %cst = arith.constant 0.000000e+00 : f32
    %5 = vector.broadcast %cst : f32 to vector<8x128xf32>
    %6 = arith.maximumf %4, %5 : vector<8x128xf32>
    %7 = math.absf %4 : vector<8x128xf32>
    %cst_4 = arith.constant 0.000000e+00 : f32
    %8 = vector.broadcast %cst_4 : f32 to vector<8x128xf32>
    %9 = arith.subf %8, %7 : vector<8x128xf32>
    %10 = math.exp %9 : vector<8x128xf32>
    %cst_5 = arith.constant 1.000000e+00 : f32
    %11 = vector.broadcast %cst_5 : f32 to vector<8x128xf32>
    %12 = arith.addf %11, %10 : vector<8x128xf32>
    %13 = math.log %12 : vector<8x128xf32>
    %14 = arith.addf %6, %13 : vector<8x128xf32>
    %cst_6 = arith.constant 2.000000e+01 : f32
    %15 = vector.broadcast %cst_6 : f32 to vector<8x128xf32>
    %16 = arith.cmpf ogt, %4, %15 : vector<8x128xf32>
    %17 = arith.select %16, %4, %14 : vector<8x128xi1>, vector<8x128xf32>
    %c0_7 = arith.constant 0 : index
    %c0_8 = arith.constant 0 : index
    %18 = vector.load %arg6[%c0_7, %c0_8] : memref<8x128xf32, #tpu.memory_space<vmem>>, vector<8x128xf32>
    tpu.vector_store %arg6[%c0_7, %c0_8], %17 {strides = array<i32>} : memref<8x128xf32, #tpu.memory_space<vmem>>, vector<8x128xf32>,
    %c0_9 = arith.constant 0 : index
    %c0_10 = arith.constant 0 : index
    %19 = vector.load %arg4[%c0_9, %c0_10] : memref<8x128xf32, #tpu.memory_space<vmem>>, vector<8x128xf32>
    %20 = tpu.reciprocal %17 {approx = true} : vector<8x128xf32> -> vector<8x128xf32>
    %21 = arith.mulf %17, %20 : vector<8x128xf32>
    %cst_11 = arith.constant 2.000000e+00 : f32
    %22 = vector.broadcast %cst_11 : f32 to vector<8x128xf32>
    %23 = arith.subf %22, %21 : vector<8x128xf32>
    %24 = arith.mulf %20, %23 : vector<8x128xf32>
    %25 = arith.subf %19, %3 : vector<8x128xf32>
    %26 = arith.mulf %25, %24 : vector<8x128xf32>
    %cst_12 = arith.constant -5.000000e-01 : f32
    %27 = vector.broadcast %cst_12 : f32 to vector<8x128xf32>
    %28 = arith.mulf %27, %26 : vector<8x128xf32>
    %29 = arith.mulf %28, %26 : vector<8x128xf32>
    %30 = math.exp %29 : vector<8x128xf32>
    %cst_13 = arith.constant 0.398942292 : f32
    %31 = vector.broadcast %cst_13 : f32 to vector<8x128xf32>
    %32 = arith.mulf %24, %31 : vector<8x128xf32>
    %33 = arith.mulf %30, %32 : vector<8x128xf32>
    %c0_14 = arith.constant 0 : index
    %c0_15 = arith.constant 0 : index
    %34 = vector.load %arg7[%c0_14, %c0_15] : memref<8x128xf32, #tpu.memory_space<vmem>>, vector<8x128xf32>
    tpu.vector_store %arg7[%c0_14, %c0_15], %33 {strides = array<i32>} : memref<8x128xf32, #tpu.memory_space<vmem>>, vector<8x128xf32>,
    %c0_16 = arith.constant 0 : index
    %35 = memref.load %arg1[%c0_16] : memref<4xf32, #tpu.memory_space<smem>>
    %36 = vector.broadcast %35 : f32 to vector<8x128xf32>
    %37 = arith.mulf %17, %36 : vector<8x128xf32>
    %38 = arith.addf %3, %37 : vector<8x128xf32>
    %c0_17 = arith.constant 0 : index
    %c0_18 = arith.constant 0 : index
    %c0_19 = arith.constant 0 : index
    %39 = vector.load %arg8[%c0_17, %c0_18, %c0_19] : memref<4x8x128xf32, #tpu.memory_space<vmem>>, vector<1x8x128xf32>
    %40 = vector.shape_cast %39 : vector<1x8x128xf32> to vector<8x128xf32>
    %41 = vector.shape_cast %38 : vector<8x128xf32> to vector<1x8x128xf32>
    tpu.vector_store %arg8[%c0_17, %c0_18, %c0_19], %41 {strides = array<i32>} : memref<4x8x128xf32, #tpu.memory_space<vmem>>, vector<1x8x128xf32>,
    %c1 = arith.constant 1 : index
    %42 = memref.load %arg1[%c1] : memref<4xf32, #tpu.memory_space<smem>>
    %43 = vector.broadcast %42 : f32 to vector<8x128xf32>
    %44 = arith.mulf %17, %43 : vector<8x128xf32>
    %45 = arith.addf %3, %44 : vector<8x128xf32>
    %c1_20 = arith.constant 1 : index
    %c0_21 = arith.constant 0 : index
    %c0_22 = arith.constant 0 : index
    %46 = vector.load %arg8[%c1_20, %c0_21, %c0_22] : memref<4x8x128xf32, #tpu.memory_space<vmem>>, vector<1x8x128xf32>
    %47 = vector.shape_cast %46 : vector<1x8x128xf32> to vector<8x128xf32>
    %48 = vector.shape_cast %45 : vector<8x128xf32> to vector<1x8x128xf32>
    tpu.vector_store %arg8[%c1_20, %c0_21, %c0_22], %48 {strides = array<i32>} : memref<4x8x128xf32, #tpu.memory_space<vmem>>, vector<1x8x128xf32>,
    %c2 = arith.constant 2 : index
    %49 = memref.load %arg1[%c2] : memref<4xf32, #tpu.memory_space<smem>>
    %50 = vector.broadcast %49 : f32 to vector<8x128xf32>
    %51 = arith.mulf %17, %50 : vector<8x128xf32>
    %52 = arith.addf %3, %51 : vector<8x128xf32>
    %c2_23 = arith.constant 2 : index
    %c0_24 = arith.constant 0 : index
    %c0_25 = arith.constant 0 : index
    %53 = vector.load %arg8[%c2_23, %c0_24, %c0_25] : memref<4x8x128xf32, #tpu.memory_space<vmem>>, vector<1x8x128xf32>
    %54 = vector.shape_cast %53 : vector<1x8x128xf32> to vector<8x128xf32>
    %55 = vector.shape_cast %52 : vector<8x128xf32> to vector<1x8x128xf32>
    tpu.vector_store %arg8[%c2_23, %c0_24, %c0_25], %55 {strides = array<i32>} : memref<4x8x128xf32, #tpu.memory_space<vmem>>, vector<1x8x128xf32>,
    %c3 = arith.constant 3 : index
    %56 = memref.load %arg1[%c3] : memref<4xf32, #tpu.memory_space<smem>>
    %57 = vector.broadcast %56 : f32 to vector<8x128xf32>
    %58 = arith.mulf %17, %57 : vector<8x128xf32>
    %59 = arith.addf %3, %58 : vector<8x128xf32>
    %c3_26 = arith.constant 3 : index
    %c0_27 = arith.constant 0 : index
    %c0_28 = arith.constant 0 : index
    %60 = vector.load %arg8[%c3_26, %c0_27, %c0_28] : memref<4x8x128xf32, #tpu.memory_space<vmem>>, vector<1x8x128xf32>
    %61 = vector.shape_cast %60 : vector<1x8x128xf32> to vector<8x128xf32>
    %62 = vector.shape_cast %59 : vector<8x128xf32> to vector<1x8x128xf32>
    tpu.vector_store %arg8[%c3_26, %c0_27, %c0_28], %62 {strides = array<i32>} : memref<4x8x128xf32, #tpu.memory_space<vmem>>, vector<1x8x128xf32>,
    %c0_29 = arith.constant 0 : index
    %c0_30 = arith.constant 0 : index
    %63 = vector.load %arg5[%c0_29, %c0_30] : memref<8x128xf32, #tpu.memory_space<vmem>>, vector<8x128xf32>
    %64 = arith.cmpf one, %63, %63 : vector<8x128xf32>
    %cst_31 = arith.constant dense<true> : vector<8x128xi1>
    %65 = arith.xori %64, %cst_31 : vector<8x128xi1>
    %cst_32 = arith.constant 0.000000e+00 : f32
    %66 = vector.broadcast %cst_32 : f32 to vector<8x128xf32>
    %67 = arith.select %65, %63, %66 : vector<8x128xi1>, vector<8x128xf32>
    %cst_33 = arith.constant 9.99999997E-7 : f32
    %68 = vector.broadcast %cst_33 : f32 to vector<8x128xf32>
    %69 = arith.maximumf %17, %68 : vector<8x128xf32>
    %70 = tpu.reciprocal %69 {approx = true} : vector<8x128xf32> -> vector<8x128xf32>
    %71 = arith.mulf %69, %70 : vector<8x128xf32>
    %cst_34 = arith.constant 2.000000e+00 : f32
    %72 = vector.broadcast %cst_34 : f32 to vector<8x128xf32>
    %73 = arith.subf %72, %71 : vector<8x128xf32>
    %74 = arith.mulf %70, %73 : vector<8x128xf32>
    %75 = math.log %69 : vector<8x128xf32>
    %76 = arith.subf %3, %67 : vector<8x128xf32>
    %77 = arith.mulf %76, %74 : vector<8x128xf32>
    %78 = arith.mulf %77, %77 : vector<8x128xf32>
    %cst_35 = arith.constant 5.000000e-01 : f32
    %79 = vector.broadcast %cst_35 : f32 to vector<8x128xf32>
    %80 = arith.mulf %79, %78 : vector<8x128xf32>
    %81 = arith.addf %75, %80 : vector<8x128xf32>
    %cst_36 = arith.constant 0.000000e+00 : f32
    %82 = vector.broadcast %cst_36 : f32 to vector<8x128xf32>
    %83 = arith.select %65, %81, %82 : vector<8x128xi1>, vector<8x128xf32>
    %84 = vector.shape_cast %83 : vector<8x128xf32> to vector<1x8x128xf32>
    %cst_37 = arith.constant dense<0.000000e+00> : vector<1xf32>
    %85 = vector.multi_reduction <add>, %84, %cst_37 [1, 2] : vector<1x8x128xf32> to vector<1xf32>
    %86 = vector.shape_cast %85 : vector<1xf32> to vector<1x1x1xf32>
    %87 = vector.extract %86[0, 0, 0] : f32 from vector<1x1x1xf32>
    %88 = vector.broadcast %87 : f32 to vector<1x1xf32>
    %89 = arith.extui %65 : vector<8x128xi1> to vector<8x128xi32>
    %90 = arith.sitofp %89 : vector<8x128xi32> to vector<8x128xf32>
    %91 = vector.shape_cast %90 : vector<8x128xf32> to vector<1x8x128xf32>
    %cst_38 = arith.constant dense<0.000000e+00> : vector<1xf32>
    %92 = vector.multi_reduction <add>, %91, %cst_38 [1, 2] : vector<1x8x128xf32> to vector<1xf32>
    %93 = vector.shape_cast %92 : vector<1xf32> to vector<1x1x1xf32>
    %94 = vector.extract %93[0, 0, 0] : f32 from vector<1x1x1xf32>
    %95 = vector.broadcast %94 : f32 to vector<1x1xf32>
    %c0_39 = arith.constant 0 : index
    %c0_40 = arith.constant 0 : index
    %96 = vector.load %arg10[%c0_39, %c0_40] : memref<1x1xf32, #tpu.memory_space<vmem>>, vector<1x1xf32>
    %97 = arith.addf %96, %88 : vector<1x1xf32>
    %c0_41 = arith.constant 0 : index
    %c0_42 = arith.constant 0 : index
    %98 = vector.load %arg10[%c0_41, %c0_42] : memref<1x1xf32, #tpu.memory_space<vmem>>, vector<1x1xf32>
    tpu.vector_store %arg10[%c0_41, %c0_42], %97 {strides = array<i32>} : memref<1x1xf32, #tpu.memory_space<vmem>>, vector<1x1xf32>,
    %c0_43 = arith.constant 0 : index
    %c0_44 = arith.constant 0 : index
    %99 = vector.load %arg11[%c0_43, %c0_44] : memref<1x1xf32, #tpu.memory_space<vmem>>, vector<1x1xf32>
    %100 = arith.addf %99, %95 : vector<1x1xf32>
    %c0_45 = arith.constant 0 : index
    %c0_46 = arith.constant 0 : index
    %101 = vector.load %arg11[%c0_45, %c0_46] : memref<1x1xf32, #tpu.memory_space<vmem>>, vector<1x1xf32>
    tpu.vector_store %arg11[%c0_45, %c0_46], %100 {strides = array<i32>} : memref<1x1xf32, #tpu.memory_space<vmem>>, vector<1x1xf32>,
    %c0_i32_47 = arith.constant 0 : i32
    %102 = arith.cmpi eq, %arg0, %c0_i32_47 : i32
    %103 = arith.extui %102 : i1 to i32
    %c0_i32_48 = arith.constant 0 : i32
    %104 = arith.cmpi ne, %103, %c0_i32_48 : i32
    scf.if %104 {
      %c0_49 = arith.constant 0 : index
      %c0_50 = arith.constant 0 : index
      %105 = vector.load %arg11[%c0_49, %c0_50] : memref<1x1xf32, #tpu.memory_space<vmem>>, vector<1x1xf32>
      %cst_51 = arith.constant 0.000000e+00 : f32
      %106 = vector.broadcast %cst_51 : f32 to vector<1x1xf32>
      %107 = arith.cmpf ogt, %105, %106 : vector<1x1xf32>
      %c0_52 = arith.constant 0 : index
      %c0_53 = arith.constant 0 : index
      %108 = vector.load %arg10[%c0_52, %c0_53] : memref<1x1xf32, #tpu.memory_space<vmem>>, vector<1x1xf32>
      %c0_54 = arith.constant 0 : index
      %c0_55 = arith.constant 0 : index
      %109 = vector.load %arg11[%c0_54, %c0_55] : memref<1x1xf32, #tpu.memory_space<vmem>>, vector<1x1xf32>
      %110 = arith.divf %108, %109 : vector<1x1xf32>
      %cst_56 = arith.constant 0x7FC00000 : f32
      %111 = vector.broadcast %cst_56 : f32 to vector<1x1xf32>
      %112 = arith.select %107, %110, %111 : vector<1x1xi1>, vector<1x1xf32>
      %c0_57 = arith.constant 0 : index
      %c0_58 = arith.constant 0 : index
      %113 = vector.load %arg9[%c0_57, %c0_58] : memref<1x1xf32, #tpu.memory_space<vmem>>, vector<1x1xf32>
      tpu.vector_store %arg9[%c0_57, %c0_58], %112 {strides = array<i32>} : memref<1x1xf32, #tpu.memory_space<vmem>>, vector<1x1xf32>,
    } else {
    }
    return
  }
  func.func @transform_0(%arg0: i32) -> i32 {
    %c0_i32 = arith.constant 0 : i32
    %c0_i32_0 = arith.constant 0 : i32
    return %c0_i32 : i32
  }
  func.func @transform_1(%arg0: i32) -> (i32, i32) {
    %c0_i32 = arith.constant 0 : i32
    %c0_i32_0 = arith.constant 0 : i32
    return %arg0, %c0_i32 : i32, i32
  }
  func.func @transform_2(%arg0: i32) -> (i32, i32) {
    %c0_i32 = arith.constant 0 : i32
    %c0_i32_0 = arith.constant 0 : i32
    return %arg0, %c0_i32 : i32, i32
  }
  func.func @transform_3(%arg0: i32) -> (i32, i32) {
    %c0_i32 = arith.constant 0 : i32
    %c0_i32_0 = arith.constant 0 : i32
    return %arg0, %c0_i32 : i32, i32
  }
  func.func @transform_4(%arg0: i32) -> (i32, i32) {
    %c0_i32 = arith.constant 0 : i32
    %c0_i32_0 = arith.constant 0 : i32
    return %arg0, %c0_i32 : i32, i32
  }
  func.func @transform_5(%arg0: i32) -> (i32, i32) {
    %c0_i32 = arith.constant 0 : i32
    %c0_i32_0 = arith.constant 0 : i32
    return %arg0, %c0_i32 : i32, i32
  }
  func.func @transform_6(%arg0: i32) -> (i32, i32) {
    %c0_i32 = arith.constant 0 : i32
    %c0_i32_0 = arith.constant 0 : i32
    return %arg0, %c0_i32 : i32, i32
  }
  func.func @transform_7(%arg0: i32) -> (i32, i32, i32) {
    %c0_i32 = arith.constant 0 : i32
    %c0_i32_0 = arith.constant 0 : i32
    %c0_i32_1 = arith.constant 0 : i32
    return %c0_i32, %arg0, %c0_i32_0 : i32, i32, i32
  }
  func.func @transform_8(%arg0: i32) -> (i32, i32) {
    %c0_i32 = arith.constant 0 : i32
    %c0_i32_0 = arith.constant 0 : i32
    %c0_i32_1 = arith.constant 0 : i32
    return %c0_i32, %c0_i32_0 : i32, i32
  }
}

</mosaic_0001>

<llo_original>
// kernel: _evaluate_jit.1
$region0: #{_evaluate_jit.1}
  #allocation0 [shape = 'u32[]', space=smem, size = 0x4, offset = 0x4, fixed_abs, tag = 'smem constant byte address 0x4 - core index']
  #allocation1 [shape = 'u32[144,128]{1,0:T(1,128)}', space=vmem, size = 0x12000, scoped, tag = 'internal scratch']
  #allocation2 [shape = 'f32[1,1]{1,0:T(1,128)}', space=vmem, size = 0x200, scoped, tag = 'scratch operand']
  #allocation3 [shape = 'f32[1,1]{1,0:T(1,128)}', space=vmem, size = 0x200, scoped, tag = 'scratch operand']
  %s0 = inlined_call_operand.vmem [shape: f32[4], index: 0, kind: input, shape index: {}]
  %s1 = inlined_call_operand.vmem [shape: f32[8,128], index: 1, kind: input, shape index: {}]
  %s2 = inlined_call_operand.vmem [shape: f32[8,128], index: 2, kind: input, shape index: {}]
  %s3 = inlined_call_operand.vmem [shape: f32[8,128], index: 3, kind: input, shape index: {}]
  %s4 = inlined_call_operand.vmem [shape: f32[8,128], index: 4, kind: input, shape index: {}]
  %s5 = inlined_call_operand.vmem [shape: f32[8,128], index: 5, kind: output, shape index: {0}]
  %s6 = inlined_call_operand.vmem [shape: f32[8,128], index: 6, kind: output, shape index: {1}]
  %s7 = inlined_call_operand.vmem [shape: f32[4,8,128], index: 7, kind: output, shape index: {2}]
  %s8 = inlined_call_operand.hbm [shape: f32[1,1], index: 8, kind: output, shape index: {3}]
  %9 = xla_tuple %s5, %s6, %s7, %s8
  %s10 = sld [smem:[#allocation0]]
  $region66: #{_evaluate_jit.1} parent=0
    _
  %s12 = ssub.s32 1, %s10
  %s13 = scalar_select 0, %s12, %s10
  $region1: #{_evaluate_jit.1} parent=0
    #allocation4 [shape = 'u8[512]{0}', space=smem, size = 0x200, scoped, tag = 'input window, operand 0, single buffered']
    #allocation5 [shape = 's32[1]{0}', space=sflag, size = 0x4, scoped, tag = 'scoped memory for _evaluate_jit.1']
    #allocation6 [shape = 's32[1]{0}', space=sflag, size = 0x4, scoped, tag = 'scoped memory for _evaluate_jit.1']
    #allocation7 [shape = 'u8[512]{0}', space=vmem, size = 0x400, scoped, tag = 'output window, operand 3, single buffered']
    %14 = vsyncpa [#allocation6], 0
    %15 = vsyncpa [#allocation5], 0
    // Predicated region
    $region2: #{_evaluate_jit.1} parent=1 // pred_check
      _
    $region3: #{_evaluate_jit.1} parent=1 // pred_check_branch
      %17 = sbr.rel (0) target = $region5
    $region4: #{_evaluate_jit.1} parent=1 // pred_region
      %s19 = ssub.s32 16, 16
      %20 = vsyncadd [#allocation6], %s19
      %s22 = sshll.u32 %s0, 4
      %s23 = int_to_ptr.vmem [resolvable:$true] %s22
      %25 = dma.vmem_to_smem %s23, 16, [#allocation4], [#allocation6]
    $region5: #{_evaluate_jit.1} parent=1 // pred_fallthru
      _
    // Predicated region
    $region6: #{_evaluate_jit.1} parent=1 // pred_check
      _
    $region7: #{_evaluate_jit.1} parent=1 // pred_check_branch
      %27 = sbr.rel (0) target = $region9
    $region8: #{_evaluate_jit.1} parent=1 // pred_region
      _
    $region9: #{_evaluate_jit.1} parent=1 // pred_fallthru
      _
    // Predicated region
    $region10: #{_evaluate_jit.1} parent=1 // pred_check
      _
    $region11: #{_evaluate_jit.1} parent=1 // pred_check_branch
      %29 = sbr.rel (0) target = $region13
    $region12: #{_evaluate_jit.1} parent=1 // pred_region
      _
    $region13: #{_evaluate_jit.1} parent=1 // pred_fallthru
      _
    // Predicated region
    $region14: #{_evaluate_jit.1} parent=1 // pred_check
      _
    $region15: #{_evaluate_jit.1} parent=1 // pred_check_branch
      %31 = sbr.rel (0) target = $region17
    $region16: #{_evaluate_jit.1} parent=1 // pred_region
      _
    $region17: #{_evaluate_jit.1} parent=1 // pred_fallthru
      _
    // Predicated region
    $region18: #{_evaluate_jit.1} parent=1 // pred_check
      _
    $region19: #{_evaluate_jit.1} parent=1 // pred_check_branch
      %33 = sbr.rel (0) target = $region21
    $region20: #{_evaluate_jit.1} parent=1 // pred_region
      _
    $region21: #{_evaluate_jit.1} parent=1 // pred_fallthru
      _
    // Predicated region
    $region22: #{_evaluate_jit.1} parent=1 // pred_check
      _
    $region23: #{_evaluate_jit.1} parent=1 // pred_check_branch
      %35 = sbr.rel (0) target = $region25
    $region24: #{_evaluate_jit.1} parent=1 // pred_region
      %36 = dma.done [#allocation6], 16
    $region25: #{_evaluate_jit.1} parent=1 // pred_fallthru
      _
    %37 = sfence
    %p38 = scmp.eq.s32.totalorder 0, 0
    // Predicated region
    $region26: #{_evaluate_jit.1} parent=1 // pred_check
      %p39 = pneg %p38
    $region27: #{_evaluate_jit.1} parent=1 // pred_check_branch
      %41 = sbr.rel (%p39) target = $region29
    $region28: #{_evaluate_jit.1} parent=1 // pred_region
      %vm42 = vcmask 0
      %43 = vst.msk [vmem:[#allocation2] sm:$0x1] %vm42, 0.0
      %44 = vst.msk [vmem:[#allocation3] sm:$0x1] %vm42, 0.0
    $region29: #{_evaluate_jit.1} parent=1 // pred_fallthru
      _
    %v45 = vld [vmem:[%s1] sm:$0xff]
    %v46 = vld [vmem:[%s2] sm:$0xff]
    %v47 = vmax.f32 %v46, 0.0
    %v48 = vand.u32 2147483647, %v46
    %v49 = vsub.f32 0.0, %v48
    %v50 = vmul.f32 %v49, 1.442695
    %v51 = vpow.pop %v50
    %v52 = vadd.f32 %v51, 1.0
    %v53 = vlog2.pop %v52
    %v54 = vmul.f32 %v53, 0.6931472
    %v55 = vadd.f32 %v47, %v54
    %vm56 = vcmp.gt.f32.partialorder %v46, 20.0
    %v57 = vsel %vm56, %v46, %v55
    %58 = vst [vmem:[%s5] sm:$0xff] %v57
    %v59 = vld [vmem:[%s3] sm:$0xff]
    %v60 = vrcp.pop %v57
    %v61 = vmul.f32 %v57, %v60
    %v62 = vsub.f32 2.0, %v61
    %v63 = vmul.f32 %v60, %v62
    %v64 = vsub.f32 %v59, %v45
    %v65 = vmul.f32 %v64, %v63
    %v66 = vmul.f32 %v65, -0.5
    %v67 = vmul.f32 %v66, %v65
    %v68 = vmul.f32 %v67, 1.442695
    %v69 = vpow.pop %v68
    %v70 = vmul.f32 %v63, 0.3989423
    %v71 = vmul.f32 %v69, %v70
    %72 = vst [vmem:[%s6] sm:$0xff] %v71
    %s73 = sld [smem:[#allocation4]]
    %v74 = vstv %s73
    %v75 = vmul.f32 %v57, %v74
    %v76 = vadd.f32 %v45, %v75
    %77 = vst [vmem:[%s7] sm:$0xff] %v76
    %s78 = sld [smem:[#allocation4 + $0x1]]
    %v79 = vstv %s78
    %v80 = vmul.f32 %v57, %v79
    %v81 = vadd.f32 %v45, %v80
    %s82 = scalar_lea.vmem %s7, 8
    %83 = vst [vmem:[%s82] sm:$0xff] %v81
    %s84 = sld [smem:[#allocation4 + $0x2]]
    %v85 = vstv %s84
    %v86 = vmul.f32 %v57, %v85
    %v87 = vadd.f32 %v45, %v86
    %s88 = scalar_lea.vmem %s7, 16
    %89 = vst [vmem:[%s88] sm:$0xff] %v87
    %s90 = sld [smem:[#allocation4 + $0x3]]
    %v91 = vstv %s90
    %v92 = vmul.f32 %v57, %v91
    %v93 = vadd.f32 %v45, %v92
    %s94 = scalar_lea.vmem %s7, 24
    %95 = vst [vmem:[%s94] sm:$0xff] %v93
    %v96 = vld [vmem:[%s4] sm:$0xff]
    %vm97 = vcmp.ne.f32.partialorder %v96, %v96
    %vm98 = vmxor %vm97, 1
    %v99 = vsel %vm98, %v96, 0.0
    %v100 = vmax.f32 %v57, 1e-06
    %v101 = vrcp.pop %v100
    %v102 = vmul.f32 %v100, %v101
    %v103 = vsub.f32 2.0, %v102
    %v104 = vmul.f32 %v101, %v103
    %v105 = vlog2.pop %v100
    %v106 = vmul.f32 %v105, 0.6931472
    %v107 = vsub.f32 %v45, %v99
    %v108 = vmul.f32 %v107, %v104
    %v109 = vmul.f32 %v108, %v108
    %v110 = vmul.f32 %v109, 0.5
    %v111 = vadd.f32 %v106, %v110
    %v112 = vsel %vm98, %v111, 0.0
    %113 = vadd.xlane.f32.xlu0 %v112
    %v114 = vpop.xlane.xlu0 %113
    %v115 = vrot.slane %v114, 4
    %v116 = vadd.f32 %v114, %v115
    %v117 = vrot.slane %v116, 2
    %v118 = vadd.f32 %v116, %v117
    %v119 = vrot.slane %v118, 1
    %v120 = vadd.f32 %v118, %v119
    %s121 = vtos %v120
    %v122 = vstv %s121
    %v123 = vsel %vm98, 1, 0
    %v124 = vcvt.s32.f32 %v123
    %125 = vadd.xlane.f32.xlu0 %v124
    %v126 = vpop.xlane.xlu0 %125
    %v127 = vrot.slane %v126, 4
    %v128 = vadd.f32 %v126, %v127
    %v129 = vrot.slane %v128, 2
    %v130 = vadd.f32 %v128, %v129
    %v131 = vrot.slane %v130, 1
    %v132 = vadd.f32 %v130, %v131
    %s133 = vtos %v132
    %v134 = vstv %s133
    %v135 = vld [vmem:[#allocation2] sm:$0x1]
    %v136 = vadd.f32 %v135, %v122
    %vm137 = vcmask 0
    %138 = vst.msk [vmem:[#allocation2] sm:$0x1] %vm137, %v136
    %v139 = vld [vmem:[#allocation3] sm:$0x1]
    %v140 = vadd.f32 %v139, %v134
    %141 = vst.msk [vmem:[#allocation3] sm:$0x1] %vm137, %v140
    // Predicated region
    $region30: #{_evaluate_jit.1} parent=1 // pred_check
      %p142 = pneg %p38
    $region31: #{_evaluate_jit.1} parent=1 // pred_check_branch
      %144 = sbr.rel (%p142) target = $region33
    $region32: #{_evaluate_jit.1} parent=1 // pred_region
      %v145 = vld [vmem:[#allocation3] sm:$0x1]
      %vm146 = vcmp.gt.f32.partialorder %v145, 0.0
      %v147 = vld [vmem:[#allocation2] sm:$0x1]
      %v148 = vrcp.pop %v145
      %v149 = vmul.f32 %v147, %v148
      %v150 = vsel %vm146, %v149, nan
      %151 = vst.msk [vmem:[#allocation7] sm:$0x1] %vm137, %v150
    $region33: #{_evaluate_jit.1} parent=1 // pred_fallthru
      _
    // Predicated region
    $region34: #{_evaluate_jit.1} parent=1 // pred_check
      _
    $region35: #{_evaluate_jit.1} parent=1 // pred_check_branch
      %153 = sbr.rel (0) target = $region37
    $region36: #{_evaluate_jit.1} parent=1 // pred_region
      _
    $region37: #{_evaluate_jit.1} parent=1 // pred_fallthru
      _
    // Predicated region
    $region38: #{_evaluate_jit.1} parent=1 // pred_check
      _
    $region39: #{_evaluate_jit.1} parent=1 // pred_check_branch
      %155 = sbr.rel (0) target = $region41
    $region40: #{_evaluate_jit.1} parent=1 // pred_region
      _
    $region41: #{_evaluate_jit.1} parent=1 // pred_fallthru
      _
    // Predicated region
    $region42: #{_evaluate_jit.1} parent=1 // pred_check
      _
    $region43: #{_evaluate_jit.1} parent=1 // pred_check_branch
      %157 = sbr.rel (0) target = $region45
    $region44: #{_evaluate_jit.1} parent=1 // pred_region
      _
    $region45: #{_evaluate_jit.1} parent=1 // pred_fallthru
      _
    // Predicated region
    $region46: #{_evaluate_jit.1} parent=1 // pred_check
      _
    $region47: #{_evaluate_jit.1} parent=1 // pred_check_branch
      %159 = sbr.rel (0) target = $region49
    $region48: #{_evaluate_jit.1} parent=1 // pred_region
      %s161 = ssub.s32 16, 16
      %162 = vsyncadd [#allocation5], %s161
      %s164 = sshll.u32 [#allocation7], 4
      %s165 = int_to_ptr.vmem [resolvable:$true] %s164
      %167 = dma.vmem_to_hbm [thread:$0]  %s165, 16, %s8, [#allocation5]
    $region49: #{_evaluate_jit.1} parent=1 // pred_fallthru
      _
    // Predicated region
    $region50: #{_evaluate_jit.1} parent=1 // pred_check
      _
    $region51: #{_evaluate_jit.1} parent=1 // pred_check_branch
      %169 = sbr.rel (0) target = $region53
    $region52: #{_evaluate_jit.1} parent=1 // pred_region
      _
    $region53: #{_evaluate_jit.1} parent=1 // pred_fallthru
      _
    // Predicated region
    $region54: #{_evaluate_jit.1} parent=1 // pred_check
      _
    $region55: #{_evaluate_jit.1} parent=1 // pred_check_branch
      %171 = sbr.rel (0) target = $region57
    $region56: #{_evaluate_jit.1} parent=1 // pred_region
      _
    $region57: #{_evaluate_jit.1} parent=1 // pred_fallthru
      _
    // Predicated region
    $region58: #{_evaluate_jit.1} parent=1 // pred_check
      _
    $region59: #{_evaluate_jit.1} parent=1 // pred_check_branch
      %173 = sbr.rel (0) target = $region61
    $region60: #{_evaluate_jit.1} parent=1 // pred_region
      _
    $region61: #{_evaluate_jit.1} parent=1 // pred_fallthru
      _
    // Predicated region
    $region62: #{_evaluate_jit.1} parent=1 // pred_check
      _
    $region63: #{_evaluate_jit.1} parent=1 // pred_check_branch
      %175 = sbr.rel (0) target = $region65
    $region64: #{_evaluate_jit.1} parent=1 // pred_region
      %176 = dma.done [#allocation5], 16
    $region65: #{_evaluate_jit.1} parent=1 // pred_fallthru
      _
    %177 = vsyncpa [#allocation5], 1
    %178 = vsyncpa [#allocation6], 1

</llo_original>
